<compile_context>
chip_gen: v6e
topology: v6e:2x2x1
jax: 0.10.0
libtpu: 0.0.40
codegen_flags: <defaults>
</compile_context>

<pallas_src>
import math

import jax
import jax.numpy as jnp
from jax.experimental import pallas as pl
from jax.experimental.pallas import tpu as pltpu


def _round_up(a, b):
    return (a + b - 1) // b * b


def _rpl_matmul_kernel(x_ref, w_ref, o_ref, acc_ref):
    # x_ref: (tm, tk) activations; w_ref: (tk, tn) pre-transposed weight panel;
    # o_ref: (tm, tn) output tile; acc_ref: f32 accumulator resident across K.
    @pl.when(pl.program_id(2) == 0)
    def _():
        acc_ref[...] = jnp.zeros_like(acc_ref)

    acc_ref[...] += jnp.dot(x_ref[...], w_ref[...],
                            preferred_element_type=jnp.float32)

    @pl.when(pl.program_id(2) == pl.num_programs(2) - 1)
    def _():
        o_ref[...] = acc_ref[...].astype(o_ref.dtype)


def _rpl_matmul_bias_kernel(x_ref, w_ref, b_ref, o_ref, acc_ref):
    @pl.when(pl.program_id(2) == 0)
    def _():
        acc_ref[...] = jnp.zeros_like(acc_ref)

    acc_ref[...] += jnp.dot(x_ref[...], w_ref[...],
                            preferred_element_type=jnp.float32)

    @pl.when(pl.program_id(2) == pl.num_programs(2) - 1)
    def _():
        # b_ref is (1, tn) f32; broadcast-add over the tm rows, then cast.
        o_ref[...] = (acc_ref[...] + b_ref[...]).astype(o_ref.dtype)


def row_parallel_linear(x, weight, bias=None, *, tm=256, tn=256, tk=1024):
    """y = x @ weight.T (+ bias); weight is (out_features, in_features)."""
    *lead, K = x.shape
    N, Kw = weight.shape
    assert Kw == K, "weight in_features mismatch"
    M = math.prod(lead) if lead else 1
    x2 = x.reshape(M, K)

    out_dtype = weight.dtype

    # One-time (K, N) transpose outside the kernel so the MXU contraction is a
    # plain row-major dot with no per-step weight-tile transpose.
    wt = weight.T

    # Effective tiles: clamp to the (padded) problem size but stay
    # sublane/lane-dense (multiples of 16 for bf16 sublanes, 128 for lanes).
    tm_eff = min(tm, _round_up(M, 16))
    tn_eff = min(tn, _round_up(N, 128))
    tk_eff = min(tk, _round_up(K, 128))

    Mp = _round_up(M, tm_eff)
    Np = _round_up(N, tn_eff)
    Kp = _round_up(K, tk_eff)

    if (Mp, Kp) != (M, K):
        x2 = jnp.pad(x2, ((0, Mp - M), (0, Kp - K)))
    if (Kp, Np) != (K, N):
        wt = jnp.pad(wt, ((0, Kp - K), (0, Np - N)))

    grid = (Mp // tm_eff, Np // tn_eff, Kp // tk_eff)

    in_specs = [
        pl.BlockSpec((tm_eff, tk_eff), lambda i, j, k: (i, k)),   # activations
        pl.BlockSpec((tk_eff, tn_eff), lambda i, j, k: (k, j)),   # weight (K,N)
    ]
    operands = [x2, wt]
    kernel = _rpl_matmul_kernel
    if bias is not None:
        b2 = bias.reshape(1, N).astype(jnp.float32)
        if Np != N:
            b2 = jnp.pad(b2, ((0, 0), (0, Np - N)))
        in_specs.append(pl.BlockSpec((1, tn_eff), lambda i, j, k: (0, j)))
        operands.append(b2)
        kernel = _rpl_matmul_bias_kernel

    # VMEM budget: double-buffered bf16 input tiles + output tile + f32 acc.
    xb = jnp.dtype(x2.dtype).itemsize
    wb = jnp.dtype(wt.dtype).itemsize
    ob = jnp.dtype(out_dtype).itemsize
    vmem_needed = (2 * xb * tm_eff * tk_eff
                   + 2 * wb * tk_eff * tn_eff
                   + 2 * ob * tm_eff * tn_eff
                   + 4 * tm_eff * tn_eff
                   + 2 * 4 * tn_eff)
    # Leave headroom, but stay well under v7x's 64 MiB physical VMEM.
    vmem_limit = int(min(60 << 20, max(32 << 20, 2 * vmem_needed)))

    cost = pl.CostEstimate(
        flops=2 * Mp * Np * Kp,
        bytes_accessed=xb * Mp * Kp + wb * Kp * Np + ob * Mp * Np,
        transcendentals=0)

    out2 = pl.pallas_call(
        kernel,
        out_shape=jax.ShapeDtypeStruct((Mp, Np), out_dtype),
        grid_spec=pltpu.PrefetchScalarGridSpec(
            num_scalar_prefetch=0,
            grid=grid,
            in_specs=in_specs,
            out_specs=pl.BlockSpec((tm_eff, tn_eff), lambda i, j, k: (i, j)),
            scratch_shapes=[pltpu.VMEM((tm_eff, tn_eff), jnp.float32)],
        ),
        compiler_params=pltpu.CompilerParams(
            dimension_semantics=("parallel", "parallel", "arbitrary"),
            vmem_limit_bytes=vmem_limit),
        cost_estimate=cost,
    )(*operands)

    # world_size == 1: no all_reduce needed.
    out2 = out2[:M, :N]
    return out2.reshape(*lead, N)


if __name__ == "__main__":
    # Module config (RowParallelLinear, world_size=1 => part_in_features == in_features).
    world_size = 1
    in_features = 256
    out_features = 256
    part_in_features = in_features // world_size
    batch, seq = 2, 8

    key = jax.random.PRNGKey(0)
    kw, kx, kb = jax.random.split(key, 3)
    # Linear.dtype defaults to bfloat16.
    weight = (jax.random.normal(kw, (out_features, part_in_features), dtype=jnp.float32)
              * 0.02).astype(jnp.bfloat16)
    x = jax.random.normal(kx, (batch, seq, part_in_features),
                          dtype=jnp.float32).astype(jnp.bfloat16)
    bias = jax.random.normal(kb, (out_features,), dtype=jnp.float32) * 0.1

    # Reference: f32 matmul.
    x32 = x.astype(jnp.float32).reshape(-1, part_in_features)
    w32 = weight.astype(jnp.float32)
    ref = jnp.dot(x32, w32.T).reshape(batch, seq, out_features)

    # bias=False (module default)
    y = row_parallel_linear(x, weight)
    y = jax.block_until_ready(y)
    assert y.shape == (batch, seq, out_features)
    assert y.dtype == jnp.bfloat16
    assert jnp.allclose(y.astype(jnp.float32), ref, atol=2e-2, rtol=2e-2), \
        "kernel output mismatch vs reference (no bias)"

    # bias=True path
    yb = row_parallel_linear(x, weight, bias)
    yb = jax.block_until_ready(yb)
    refb = ref + bias[None, None, :]
    assert jnp.allclose(yb.astype(jnp.float32), refb, atol=2e-2, rtol=2e-2), \
        "kernel output mismatch vs reference (bias)"

    print("KERNEL_OK")
</pallas_src>

<mosaic_0001>
module attributes {stable_mosaic.version = 11 : i64} {
  func.func @_rpl_matmul_kernel(%arg0: i32, %arg1: i32, %arg2: i32, %arg3: memref<16x256xbf16, #tpu.memory_space<vmem>>, %arg4: memref<256x256xbf16, #tpu.memory_space<vmem>>, %arg5: memref<16x256xbf16, #tpu.memory_space<vmem>>, %arg6: memref<16x256xf32, #tpu.memory_space<vmem>>) attributes {dimension_semantics = [#tpu.dimension_semantics<parallel>, #tpu.dimension_semantics<parallel>, #tpu.dimension_semantics<arbitrary>], iteration_bounds = array<i64: 1, 1, 1>, scalar_prefetch = 0 : i64, scratch_operands = 1 : i64, tpu.core_type = #tpu.core_type<tc>, window_params = [{transform_indices = @transform_0, window_bounds = array<i64: 16, 256>}, {transform_indices = @transform_1, window_bounds = array<i64: 256, 256>}, {transform_indices = @transform_2, window_bounds = array<i64: 16, 256>}]} {
    %c0_i32 = arith.constant 0 : i32
    %0 = arith.cmpi eq, %arg2, %c0_i32 : i32
    %1 = arith.extui %0 : i1 to i32
    %c0_i32_0 = arith.constant 0 : i32
    %2 = arith.cmpi ne, %1, %c0_i32_0 : i32
    scf.if %2 {
      %cst_10 = arith.constant 0.000000e+00 : f32
      %12 = vector.broadcast %cst_10 : f32 to vector<16x256xf32>
      %c0_11 = arith.constant 0 : index
      %c0_12 = arith.constant 0 : index
      %13 = vector.load %arg6[%c0_11, %c0_12] : memref<16x256xf32, #tpu.memory_space<vmem>>, vector<16x256xf32>
      tpu.vector_store %arg6[%c0_11, %c0_12], %12 {strides = array<i32>} : memref<16x256xf32, #tpu.memory_space<vmem>>, vector<16x256xf32>,
    } else {
    }
    %c0 = arith.constant 0 : index
    %c0_1 = arith.constant 0 : index
    %3 = vector.load %arg6[%c0, %c0_1] : memref<16x256xf32, #tpu.memory_space<vmem>>, vector<16x256xf32>
    %c0_2 = arith.constant 0 : index
    %c0_3 = arith.constant 0 : index
    %4 = vector.load %arg3[%c0_2, %c0_3] : memref<16x256xbf16, #tpu.memory_space<vmem>>, vector<16x256xbf16>
    %c0_4 = arith.constant 0 : index
    %c0_5 = arith.constant 0 : index
    %5 = vector.load %arg4[%c0_4, %c0_5] : memref<256x256xbf16, #tpu.memory_space<vmem>>, vector<256x256xbf16>
    %cst = arith.constant dense<0.000000e+00> : vector<16x256xf32>
    %6 = tpu.matmul %4, %5, %cst {dimension_numbers = #tpu.dot_dimension_numbers<[1], [0], [0], [1], [0, 0, 1, 1], [], []>} : vector<16x256xbf16>, vector<256x256xbf16>, vector<16x256xf32> -> vector<16x256xf32>
    %7 = arith.addf %3, %6 : vector<16x256xf32>
    %c0_6 = arith.constant 0 : index
    %c0_7 = arith.constant 0 : index
    %8 = vector.load %arg6[%c0_6, %c0_7] : memref<16x256xf32, #tpu.memory_space<vmem>>, vector<16x256xf32>
    tpu.vector_store %arg6[%c0_6, %c0_7], %7 {strides = array<i32>} : memref<16x256xf32, #tpu.memory_space<vmem>>, vector<16x256xf32>,
    %c0_i32_8 = arith.constant 0 : i32
    %9 = arith.cmpi eq, %arg2, %c0_i32_8 : i32
    %10 = arith.extui %9 : i1 to i32
    %c0_i32_9 = arith.constant 0 : i32
    %11 = arith.cmpi ne, %10, %c0_i32_9 : i32
    scf.if %11 {
      %c0_10 = arith.constant 0 : index
      %c0_11 = arith.constant 0 : index
      %12 = vector.load %arg6[%c0_10, %c0_11] : memref<16x256xf32, #tpu.memory_space<vmem>>, vector<16x256xf32>
      %13 = arith.truncf %12 : vector<16x256xf32> to vector<16x256xbf16>
      %c0_12 = arith.constant 0 : index
      %c0_13 = arith.constant 0 : index
      %14 = vector.load %arg5[%c0_12, %c0_13] : memref<16x256xbf16, #tpu.memory_space<vmem>>, vector<16x256xbf16>
      tpu.vector_store %arg5[%c0_12, %c0_13], %13 {strides = array<i32>} : memref<16x256xbf16, #tpu.memory_space<vmem>>, vector<16x256xbf16>,
    } else {
    }
    return
  }
  func.func @transform_0(%arg0: i32, %arg1: i32, %arg2: i32) -> (i32, i32) {
    %c0_i32 = arith.constant 0 : i32
    return %arg0, %arg2 : i32, i32
  }
  func.func @transform_1(%arg0: i32, %arg1: i32, %arg2: i32) -> (i32, i32) {
    %c0_i32 = arith.constant 0 : i32
    return %arg2, %arg1 : i32, i32
  }
  func.func @transform_2(%arg0: i32, %arg1: i32, %arg2: i32) -> (i32, i32) {
    %c0_i32 = arith.constant 0 : i32
    return %arg0, %arg1 : i32, i32
  }
}

</mosaic_0001>

<llo_original>
// kernel: tpu_custom_call.1
$region0: #{tpu_custom_call.1}
  #allocation0 [shape = 'u32[]', space=smem, size = 0x4, offset = 0x4, fixed_abs, tag = 'smem constant byte address 0x4 - core index']
  #allocation1 [shape = 'u32[144,128]{1,0:T(1,128)}', space=vmem, size = 0x12000, scoped, tag = 'internal scratch']
  #allocation2 [shape = 'f32[16,256]{1,0:T(8,128)}', space=vmem, size = 0x4000, scoped, tag = 'scratch operand']
  %s0 = inlined_call_operand.hbm [shape: bf16[16,256], index: 0, kind: input, shape index: {}]
  %s1 = inlined_call_operand.hbm [shape: bf16[256,256], index: 1, kind: input, shape index: {}]
  %s2 = inlined_call_operand.hbm [shape: bf16[16,256], index: 2, kind: output, shape index: {}]
  %s3 = sld [smem:[#allocation0]]
  $region34: #{tpu_custom_call.1} parent=0
    _
  %s5 = ssub.s32 1, %s3
  %s6 = scalar_select 0, %s5, %s3
  $region1: #{tpu_custom_call.1} parent=0
    #allocation3 [shape = 'u8[8192]{0}', space=vmem, size = 0x2000, scoped, tag = 'input window, operand 0, single buffered']
    #allocation4 [shape = 's32[1]{0}', space=sflag, size = 0x4, scoped, tag = 'scoped memory for tpu_custom_call.1']
    #allocation5 [shape = 's32[1]{0}', space=sflag, size = 0x4, scoped, tag = 'scoped memory for tpu_custom_call.1']
    #allocation6 [shape = 'u8[131072]{0}', space=vmem, size = 0x20000, scoped, tag = 'input window, operand 1, single buffered']
    #allocation7 [shape = 's32[1]{0}', space=sflag, size = 0x4, scoped, tag = 'scoped memory for tpu_custom_call.1']
    #allocation8 [shape = 'u8[8192]{0}', space=vmem, size = 0x2000, scoped, tag = 'output window, operand 0, single buffered']
    %7 = vsyncpa [#allocation4], 0
    %8 = vsyncpa [#allocation7], 0
    %9 = vsyncpa [#allocation5], 0
    // Predicated region
    $region2: #{tpu_custom_call.1} parent=1 // pred_check
      _
    $region3: #{tpu_custom_call.1} parent=1 // pred_check_branch
      %11 = sbr.rel (0) target = $region5
    $region4: #{tpu_custom_call.1} parent=1 // pred_region
      %s13 = ssub.s32 256, 256
      %14 = vsyncadd [#allocation4], %s13
      %s15 = sshll.u32 [#allocation3], 4
      %s16 = int_to_ptr.vmem [resolvable:$true] %s15
      %21 = dma.hbm_to_vmem [thread:$0]  %s0, 256, %s16, [#allocation4], 128, 128, 8
    $region5: #{tpu_custom_call.1} parent=1 // pred_fallthru
      _
    // Predicated region
    $region6: #{tpu_custom_call.1} parent=1 // pred_check
      _
    $region7: #{tpu_custom_call.1} parent=1 // pred_check_branch
      %23 = sbr.rel (0) target = $region9
    $region8: #{tpu_custom_call.1} parent=1 // pred_region
      %s25 = ssub.s32 4096, 4096
      %26 = vsyncadd [#allocation7], %s25
      %s27 = sshll.u32 [#allocation6], 4
      %s28 = int_to_ptr.vmem [resolvable:$true] %s27
      %33 = dma.hbm_to_vmem [thread:$0]  %s1, 4096, %s28, [#allocation7], 128, 128, 8
    $region9: #{tpu_custom_call.1} parent=1 // pred_fallthru
      _
    // Predicated region
    $region10: #{tpu_custom_call.1} parent=1 // pred_check
      _
    $region11: #{tpu_custom_call.1} parent=1 // pred_check_branch
      %35 = sbr.rel (0) target = $region13
    $region12: #{tpu_custom_call.1} parent=1 // pred_region
      %36 = dma.done [#allocation4], 256
    $region13: #{tpu_custom_call.1} parent=1 // pred_fallthru
      _
    // Predicated region
    $region14: #{tpu_custom_call.1} parent=1 // pred_check
      _
    $region15: #{tpu_custom_call.1} parent=1 // pred_check_branch
      %38 = sbr.rel (0) target = $region17
    $region16: #{tpu_custom_call.1} parent=1 // pred_region
      %39 = dma.done [#allocation7], 4096
    $region17: #{tpu_custom_call.1} parent=1 // pred_fallthru
      _
    %p40 = scmp.eq.s32.totalorder 0, 0
    // Predicated region
    $region18: #{tpu_custom_call.1} parent=1 // pred_check
      %p41 = pneg %p40
    $region19: #{tpu_custom_call.1} parent=1 // pred_check_branch
      %43 = sbr.rel (%p41) target = $region21
    $region20: #{tpu_custom_call.1} parent=1 // pred_region
      %44 = vst [vmem:[#allocation2] sm:$0xff] 0.0
      %45 = vst [vmem:[#allocation2 + $0x8] sm:$0xff] 0.0
      %46 = vst [vmem:[#allocation2 + $0x10] sm:$0xff] 0.0
      %47 = vst [vmem:[#allocation2 + $0x18] sm:$0xff] 0.0
    $region21: #{tpu_custom_call.1} parent=1 // pred_fallthru
      _
    %v48 = vld [vmem:[#allocation2] sm:$0xff]
    %v49 = vld [vmem:[#allocation2 + $0x8] sm:$0xff]
    %v50 = vld [vmem:[#allocation2 + $0x10] sm:$0xff]
    %v51 = vld [vmem:[#allocation2 + $0x18] sm:$0xff]
    %v52 = vld [vmem:[#allocation3] sm:$0xff]
    %v53 = vld [vmem:[#allocation3 + $0x8] sm:$0xff]
    %v54 = vld [vmem:[#allocation6] sm:$0xff]
    %v55 = vld [vmem:[#allocation6 + $0x8] sm:$0xff]
    %v56 = vld [vmem:[#allocation6 + $0x10] sm:$0xff]
    %v57 = vld [vmem:[#allocation6 + $0x18] sm:$0xff]
    %v58 = vld [vmem:[#allocation6 + $0x20] sm:$0xff]
    %v59 = vld [vmem:[#allocation6 + $0x28] sm:$0xff]
    %v60 = vld [vmem:[#allocation6 + $0x30] sm:$0xff]
    %v61 = vld [vmem:[#allocation6 + $0x38] sm:$0xff]
    %v62 = vld [vmem:[#allocation6 + $0x40] sm:$0xff]
    %v63 = vld [vmem:[#allocation6 + $0x48] sm:$0xff]
    %v64 = vld [vmem:[#allocation6 + $0x50] sm:$0xff]
    %v65 = vld [vmem:[#allocation6 + $0x58] sm:$0xff]
    %v66 = vld [vmem:[#allocation6 + $0x60] sm:$0xff]
    %v67 = vld [vmem:[#allocation6 + $0x68] sm:$0xff]
    %v68 = vld [vmem:[#allocation6 + $0x70] sm:$0xff]
    %v69 = vld [vmem:[#allocation6 + $0x78] sm:$0xff]
    %v70 = vld [vmem:[#allocation6 + $0x80] sm:$0xff]
    %v71 = vld [vmem:[#allocation6 + $0x88] sm:$0xff]
    %v72 = vld [vmem:[#allocation6 + $0x90] sm:$0xff]
    %v73 = vld [vmem:[#allocation6 + $0x98] sm:$0xff]
    %v74 = vld [vmem:[#allocation6 + $0xa0] sm:$0xff]
    %v75 = vld [vmem:[#allocation6 + $0xa8] sm:$0xff]
    %v76 = vld [vmem:[#allocation6 + $0xb0] sm:$0xff]
    %v77 = vld [vmem:[#allocation6 + $0xb8] sm:$0xff]
    %v78 = vld [vmem:[#allocation6 + $0xc0] sm:$0xff]
    %v79 = vld [vmem:[#allocation6 + $0xc8] sm:$0xff]
    %v80 = vld [vmem:[#allocation6 + $0xd0] sm:$0xff]
    %v81 = vld [vmem:[#allocation6 + $0xd8] sm:$0xff]
    %v82 = vld [vmem:[#allocation6 + $0xe0] sm:$0xff]
    %v83 = vld [vmem:[#allocation6 + $0xe8] sm:$0xff]
    %v84 = vld [vmem:[#allocation6 + $0xf0] sm:$0xff]
    %v85 = vld [vmem:[#allocation6 + $0xf8] sm:$0xff]
    %v88 = vunpack.c.l.b16 %v52
    %v89 = vunpack.c.h.b16 %v52
    %v90 = vunpack.c.l.b16 %v53
    %v91 = vunpack.c.h.b16 %v53
    %v92 = vpack.c.b16 %v90, %v88
    %v93 = vpack.c.b16 %v91, %v89
    %v128 = vunpack.c.l.b16 %v54
    %v129 = vunpack.c.h.b16 %v54
    %v130 = vunpack.c.l.b16 %v55
    %v131 = vunpack.c.h.b16 %v55
    %v132 = vunpack.c.l.b16 %v56
    %v133 = vunpack.c.h.b16 %v56
    %v134 = vunpack.c.l.b16 %v57
    %v135 = vunpack.c.h.b16 %v57
    %v136 = vunpack.c.l.b16 %v58
    %v137 = vunpack.c.h.b16 %v58
    %v138 = vunpack.c.l.b16 %v59
    %v139 = vunpack.c.h.b16 %v59
    %v140 = vunpack.c.l.b16 %v60
    %v141 = vunpack.c.h.b16 %v60
    %v142 = vunpack.c.l.b16 %v61
    %v143 = vunpack.c.h.b16 %v61
    %v144 = vunpack.c.l.b16 %v62
    %v145 = vunpack.c.h.b16 %v62
    %v146 = vunpack.c.l.b16 %v63
    %v147 = vunpack.c.h.b16 %v63
    %v148 = vunpack.c.l.b16 %v64
    %v149 = vunpack.c.h.b16 %v64
    %v150 = vunpack.c.l.b16 %v65
    %v151 = vunpack.c.h.b16 %v65
    %v152 = vunpack.c.l.b16 %v66
    %v153 = vunpack.c.h.b16 %v66
    %v154 = vunpack.c.l.b16 %v67
    %v155 = vunpack.c.h.b16 %v67
    %v156 = vunpack.c.l.b16 %v68
    %v157 = vunpack.c.h.b16 %v68
    %v158 = vunpack.c.l.b16 %v69
    %v159 = vunpack.c.h.b16 %v69
    %v160 = vunpack.c.l.b16 %v70
    %v161 = vunpack.c.h.b16 %v70
    %v162 = vunpack.c.l.b16 %v71
    %v163 = vunpack.c.h.b16 %v71
    %v164 = vunpack.c.l.b16 %v72
    %v165 = vunpack.c.h.b16 %v72
    %v166 = vunpack.c.l.b16 %v73
    %v167 = vunpack.c.h.b16 %v73
    %v168 = vunpack.c.l.b16 %v74
    %v169 = vunpack.c.h.b16 %v74
    %v170 = vunpack.c.l.b16 %v75
    %v171 = vunpack.c.h.b16 %v75
    %v172 = vunpack.c.l.b16 %v76
    %v173 = vunpack.c.h.b16 %v76
    %v174 = vunpack.c.l.b16 %v77
    %v175 = vunpack.c.h.b16 %v77
    %v176 = vunpack.c.l.b16 %v78
    %v177 = vunpack.c.h.b16 %v78
    %v178 = vunpack.c.l.b16 %v79
    %v179 = vunpack.c.h.b16 %v79
    %v180 = vunpack.c.l.b16 %v80
    %v181 = vunpack.c.h.b16 %v80
    %v182 = vunpack.c.l.b16 %v81
    %v183 = vunpack.c.h.b16 %v81
    %v184 = vunpack.c.l.b16 %v82
    %v185 = vunpack.c.h.b16 %v82
    %v186 = vunpack.c.l.b16 %v83
    %v187 = vunpack.c.h.b16 %v83
    %v188 = vunpack.c.l.b16 %v84
    %v189 = vunpack.c.h.b16 %v84
    %v190 = vunpack.c.l.b16 %v85
    %v191 = vunpack.c.h.b16 %v85
    %v192 = vpack.c.b16 %v130, %v128
    %v193 = vpack.c.b16 %v131, %v129
    %v194 = vpack.c.b16 %v134, %v132
    %v195 = vpack.c.b16 %v135, %v133
    %v196 = vpack.c.b16 %v138, %v136
    %v197 = vpack.c.b16 %v139, %v137
    %v198 = vpack.c.b16 %v142, %v140
    %v199 = vpack.c.b16 %v143, %v141
    %v200 = vpack.c.b16 %v146, %v144
    %v201 = vpack.c.b16 %v147, %v145
    %v202 = vpack.c.b16 %v150, %v148
    %v203 = vpack.c.b16 %v151, %v149
    %v204 = vpack.c.b16 %v154, %v152
    %v205 = vpack.c.b16 %v155, %v153
    %v206 = vpack.c.b16 %v158, %v156
    %v207 = vpack.c.b16 %v159, %v157
    %v208 = vpack.c.b16 %v162, %v160
    %v209 = vpack.c.b16 %v163, %v161
    %v210 = vpack.c.b16 %v166, %v164
    %v211 = vpack.c.b16 %v167, %v165
    %v212 = vpack.c.b16 %v170, %v168
    %v213 = vpack.c.b16 %v171, %v169
    %v214 = vpack.c.b16 %v174, %v172
    %v215 = vpack.c.b16 %v175, %v173
    %v216 = vpack.c.b16 %v178, %v176
    %v217 = vpack.c.b16 %v179, %v177
    %v218 = vpack.c.b16 %v182, %v180
    %v219 = vpack.c.b16 %v183, %v181
    %v220 = vpack.c.b16 %v186, %v184
    %v221 = vpack.c.b16 %v187, %v185
    %v222 = vpack.c.b16 %v190, %v188
    %v223 = vpack.c.b16 %v191, %v189
    %256 = vmatprep.subr.bf16.mxu0 %v207
    %257 = vmatpush1.bf16.msra.mxu0 %v206
    %258 = vmatprep.subr.bf16.mxu0 %v205
    %259 = vmatpush1.bf16.msra.mxu0 %v204
    %260 = vmatprep.subr.bf16.mxu0 %v203
    %261 = vmatpush1.bf16.msra.mxu0 %v202
    %262 = vmatprep.subr.bf16.mxu0 %v201
    %263 = vmatpush1.bf16.msra.mxu0 %v200
    %264 = vmatprep.subr.bf16.mxu0 %v199
    %265 = vmatpush1.bf16.msra.mxu0 %v198
    %266 = vmatprep.subr.bf16.mxu0 %v197
    %267 = vmatpush1.bf16.msra.mxu0 %v196
    %268 = vmatprep.subr.bf16.mxu0 %v195
    %269 = vmatpush1.bf16.msra.mxu0 %v194
    %270 = vmatprep.subr.bf16.mxu0 %v193
    %271 = vmatpush1.bf16.msra.mxu0 %v192
    %272 = vmatprep.subr.bf16.mxu0 %v223
    %273 = vmatpush2.bf16.msra.mxu0 %v222
    %274 = vmatprep.subr.bf16.mxu0 %v221
    %275 = vmatpush2.bf16.msra.mxu0 %v220
    %276 = vmatprep.subr.bf16.mxu0 %v219
    %277 = vmatpush2.bf16.msra.mxu0 %v218
    %278 = vmatprep.subr.bf16.mxu0 %v217
    %279 = vmatpush2.bf16.msra.mxu0 %v216
    %280 = vmatprep.subr.bf16.mxu0 %v215
    %281 = vmatpush2.bf16.msra.mxu0 %v214
    %282 = vmatprep.subr.bf16.mxu0 %v213
    %283 = vmatpush2.bf16.msra.mxu0 %v212
    %284 = vmatprep.subr.bf16.mxu0 %v211
    %285 = vmatpush2.bf16.msra.mxu0 %v210
    %286 = vmatprep.subr.bf16.mxu0 %v209
    %287 = vmatpush2.bf16.msra.mxu0 %v208
    %288 = vmatprep.mubr.bf16.mxu0 %v93
    %289 = vmatmul.mubr.bf16.gmra.mxu0 %v92
    %v290 = vpop.f32.mrf.mxu0
    %v291 = vadd.f32 0.0, %v290
    %v292 = vpop.f32.mrf.mxu0
    %v293 = vadd.f32 0.0, %v292
    %v294 = vpop.f32.mrf.mxu0
    %v295 = vadd.f32 0.0, %v294
    %v296 = vpop.f32.mrf.mxu0
    %v297 = vadd.f32 0.0, %v296
    %298 = vdwg.mxu0
    %v299 = vadd.f32 %v48, %v291
    %v300 = vadd.f32 %v49, %v293
    %v301 = vadd.f32 %v50, %v295
    %v302 = vadd.f32 %v51, %v297
    %303 = vst [vmem:[#allocation2] sm:$0xff] %v299
    %304 = vst [vmem:[#allocation2 + $0x8] sm:$0xff] %v300
    %305 = vst [vmem:[#allocation2 + $0x10] sm:$0xff] %v301
    %306 = vst [vmem:[#allocation2 + $0x18] sm:$0xff] %v302
    // Predicated region
    $region22: #{tpu_custom_call.1} parent=1 // pred_check
      %p307 = pneg %p40
    $region23: #{tpu_custom_call.1} parent=1 // pred_check_branch
      %309 = sbr.rel (%p307) target = $region25
    $region24: #{tpu_custom_call.1} parent=1 // pred_region
      %v310 = vld [vmem:[#allocation2] sm:$0xff]
      %v311 = vld [vmem:[#allocation2 + $0x8] sm:$0xff]
      %v312 = vld [vmem:[#allocation2 + $0x10] sm:$0xff]
      %v313 = vld [vmem:[#allocation2 + $0x18] sm:$0xff]
      %v314 = vpack.c.bf16 %v312, %v310
      %v315 = vpack.c.bf16 %v313, %v311
      %v318 = vunpack.c.l.b16 %v314
      %v319 = vunpack.c.l.b16 %v315
      %v320 = vunpack.c.h.b16 %v314
      %v321 = vunpack.c.h.b16 %v315
      %v322 = vpack.c.b16 %v319, %v318
      %v323 = vpack.c.b16 %v321, %v320
      %326 = vst [vmem:[#allocation8] sm:$0xff] %v322
      %327 = vst [vmem:[#allocation8 + $0x8] sm:$0xff] %v323
    $region25: #{tpu_custom_call.1} parent=1 // pred_fallthru
      _
    // Predicated region
    $region26: #{tpu_custom_call.1} parent=1 // pred_check
      _
    $region27: #{tpu_custom_call.1} parent=1 // pred_check_branch
      %329 = sbr.rel (0) target = $region29
    $region28: #{tpu_custom_call.1} parent=1 // pred_region
      %s331 = ssub.s32 256, 256
      %332 = vsyncadd [#allocation5], %s331
      %s333 = sshll.u32 [#allocation8], 4
      %s334 = int_to_ptr.vmem [resolvable:$true] %s333
      %339 = dma.vmem_to_hbm [thread:$0]  %s334, 256, %s2, [#allocation5], 128, 128, 8
    $region29: #{tpu_custom_call.1} parent=1 // pred_fallthru
      _
    // Predicated region
    $region30: #{tpu_custom_call.1} parent=1 // pred_check
      _
    $region31: #{tpu_custom_call.1} parent=1 // pred_check_branch
      %341 = sbr.rel (0) target = $region33
    $region32: #{tpu_custom_call.1} parent=1 // pred_region
      %342 = dma.done [#allocation5], 256
    $region33: #{tpu_custom_call.1} parent=1 // pred_fallthru
      _
    %343 = vsyncpa [#allocation4], 1
    %344 = vsyncpa [#allocation7], 1
    %345 = vsyncpa [#allocation5], 1

</llo_original>
